<compile_context>
chip_gen: v6e
topology: v6e:2x2x1
jax: 0.10.0
libtpu: 0.0.40
codegen_flags: <defaults>
</compile_context>

<pallas_src>
import jax
import jax.numpy as jnp
from jax.experimental import pallas as pl
from jax.experimental.pallas import tpu as pltpu

LEAKY_SLOPE = 0.2     # nn.LeakyReLU(0.2)
EPS = 1e-8
BN_EPS = 1e-5
LANE = 128


def _cosine_similarity(x):
    """Pairwise cosine similarity of rows of x: (B, D) -> (B, B)."""
    sumsq = jnp.sum(x * x, axis=-1, keepdims=True)
    xn = x * jax.lax.rsqrt(jnp.maximum(sumsq, EPS * EPS))   # rsqrt -> EUP slot
    # Contract the shared feature dim directly; avoids materializing xn.T.
    return jax.lax.dot_general(
        xn, xn,
        dimension_numbers=(((1,), (1,)), ((), ())),
        preferred_element_type=jnp.float32)


def _graph_agg(x, cs, thr):
    """Thresholded, row-normalized cosine-similarity aggregation (f32)."""
    adj = jnp.where(cs >= thr, cs, jnp.zeros_like(cs))            # (B, B)
    deg = jnp.sum(adj, axis=-1, keepdims=True)
    adj = adj / jnp.maximum(deg, EPS)                             # row-normalized
    return jnp.dot(adj, x, preferred_element_type=jnp.float32)    # (B, D) f32


def _bn_affine(h, g, beta):
    """Training-mode BatchNorm1d with affine (batch statistics)."""
    mu = jnp.mean(h, axis=0, keepdims=True)
    var = jnp.mean((h - mu) ** 2, axis=0, keepdims=True)
    return (h - mu) * jax.lax.rsqrt(var + BN_EPS) * g + beta


def res152_head_kernel(thr_ref, feat_ref,
                       g1_ref, be1_ref, g2_ref, be2_ref, bfc_ref,
                       w1_hbm, w2_hbm, wfc_hbm,
                       out_ref, h_ref,
                       w1_buf, w2_buf, wfc_buf, sem):
    # TODO(synk): AdapGBN source is not provided in the reference; implemented
    # as thresholded cosine-similarity graph aggregation + Linear + training-
    # mode BatchNorm with affine.  The linear bias is omitted: a per-feature
    # constant bias is exactly cancelled by the BN batch-mean subtraction.
    # `phase` (train/eval BN stats) is not modelled.

    # Start ALL weight streams immediately; compute the graph work (which only
    # needs `feat`) while the DMAs are in flight.
    w1_cp = pltpu.make_async_copy(w1_hbm, w1_buf, sem.at[0])
    w2_cp = pltpu.make_async_copy(w2_hbm, w2_buf, sem.at[1])
    wfc_cp = pltpu.make_async_copy(wfc_hbm, wfc_buf, sem.at[2])
    w1_cp.start()
    w2_cp.start()
    wfc_cp.start()

    thr = thr_ref[0, 0]
    x = feat_ref[...]                                             # (B, D) pooled, f32

    # --- AdapGBN1 + LeakyReLU(0.2) ---
    cs1 = _cosine_similarity(x)
    h1 = _graph_agg(x, cs1, thr)                                  # overlaps w1 DMA
    w1_cp.wait()
    x = jnp.dot(h1.astype(jnp.bfloat16), w1_buf[...],
                preferred_element_type=jnp.float32)
    x = _bn_affine(x, g1_ref[...], be1_ref[...])
    x = jnp.where(x > 0, x, LEAKY_SLOPE * x)

    # --- AdapGBN2 ---
    cs2 = _cosine_similarity(x)
    h2 = _graph_agg(x, cs2, thr)                                  # overlaps w2 DMA
    w2_cp.wait()
    x = jnp.dot(h2.astype(jnp.bfloat16), w2_buf[...],
                preferred_element_type=jnp.float32)
    x = _bn_affine(x, g2_ref[...], be2_ref[...])

    # --- fc (weights lane-padded to a multiple of 128 -> unmasked stores) ---
    wfc_cp.wait()
    out = jnp.dot(x.astype(jnp.bfloat16), wfc_buf[...],
                  preferred_element_type=jnp.float32) + bfc_ref[...]

    out_ref[...] = out.astype(out_ref.dtype)
    h_ref[...] = x.astype(h_ref.dtype)


def pack_params(params):
    """One-time weight prep (bf16 cast + lane padding), hoisted out of forward."""
    D = params["w1"].shape[0]
    nc = params["wfc"].shape[1]
    npad = max(LANE, pl.cdiv(nc, LANE) * LANE)
    wfc = jnp.zeros((D, npad), jnp.bfloat16).at[:, :nc].set(
        params["wfc"].astype(jnp.bfloat16))
    bfc = jnp.zeros((1, npad), jnp.float32).at[:, :nc].set(
        params["bfc"].astype(jnp.float32))
    packed = dict(
        w1=params["w1"].astype(jnp.bfloat16),
        w2=params["w2"].astype(jnp.bfloat16),
        wfc=wfc, bfc=bfc,
        g1=params["g1"].astype(jnp.float32),
        be1=params["be1"].astype(jnp.float32),
        g2=params["g2"].astype(jnp.float32),
        be2=params["be2"].astype(jnp.float32),
        num_classes=nc,
    )
    return packed


def res152_feature_forward(x_nchw, packed, phase, threshold):
    """Returns (logits, features) like Res152Feature.forward."""
    # TODO(synk): the pretrained ResNet-152 conv trunk (models.resnet152) is not
    # re-implemented; x_nchw stands for the trunk's (B, C, H, W) feature map
    # just before the final average pool.  `phase` only switches train/eval BN
    # statistics inside AdapGBN; this implementation always uses batch stats.
    del phase
    B, C, H, W = x_nchw.shape
    D = C
    num_classes = packed["num_classes"]
    npad = packed["wfc"].shape[1]

    # Global average pool (AdaptiveAvgPool2d((1,1)) + view) hoisted out of the
    # kernel: the kernel never DMAs the spatial map.
    feat = jnp.mean(x_nchw.astype(jnp.float32), axis=(2, 3))      # (B, D)
    thr = jnp.full((1, 1), threshold, jnp.float32)

    # Resident VMEM ~ weight scratch (bf16) + f32 activations + small vectors.
    resident_bytes = (2 * D * D * 2 + D * npad * 2
                      + 6 * B * D * 4 + B * npad * 4
                      + 2 * B * B * 4
                      + 6 * max(D, npad) * 4)
    vmem_limit = int(max(resident_bytes + (4 << 20), 16 << 20))

    vmem = pl.BlockSpec(memory_space=pltpu.MemorySpace.VMEM)
    smem = pl.BlockSpec(memory_space=pltpu.MemorySpace.SMEM)
    hbm = pl.BlockSpec(memory_space=pl.ANY)

    out_pad, h = pl.pallas_call(
        res152_head_kernel,
        out_shape=(jax.ShapeDtypeStruct((B, npad), jnp.float32),
                   jax.ShapeDtypeStruct((B, D), jnp.float32)),
        in_specs=[smem, vmem,
                  vmem, vmem, vmem, vmem, vmem,
                  hbm, hbm, hbm],
        out_specs=(vmem, vmem),
        scratch_shapes=[pltpu.VMEM((D, D), jnp.bfloat16),
                        pltpu.VMEM((D, D), jnp.bfloat16),
                        pltpu.VMEM((D, npad), jnp.bfloat16),
                        pltpu.SemaphoreType.DMA((3,))],
        compiler_params=pltpu.CompilerParams(vmem_limit_bytes=vmem_limit),
    )(thr, feat,
      packed["g1"], packed["be1"], packed["g2"], packed["be2"], packed["bfc"],
      packed["w1"], packed["w2"], packed["wfc"])

    return out_pad[:, :num_classes], h


def init_params(key, d, num_classes):
    """Deterministic synthetic parameters (shapes implied by the module)."""
    k1, k2, k3 = jax.random.split(key, 3)
    s = 1.0 / jnp.sqrt(jnp.float32(d))
    return dict(
        # AdapGBN1 (in=d, out=d): linear (bias dropped, cancelled by BN) + BN affine
        w1=jax.random.normal(k1, (d, d), jnp.float32) * s,
        g1=jnp.ones((1, d), jnp.float32),
        be1=jnp.zeros((1, d), jnp.float32),
        # AdapGBN2 (in=d, out=d)
        w2=jax.random.normal(k2, (d, d), jnp.float32) * s,
        g2=jnp.ones((1, d), jnp.float32),
        be2=jnp.zeros((1, d), jnp.float32),
        # fc = nn.Linear(fc_in_dim, num_classes); stored as (in, out)
        wfc=jax.random.normal(k3, (d, num_classes), jnp.float32) * s,
        bfc=jnp.zeros((1, num_classes), jnp.float32),
    )


def _reference_forward(x_nchw, packed, threshold):
    """Pure-JAX reference mirroring the kernel math (bf16 weights, f32 acc)."""
    feat = jnp.mean(x_nchw.astype(jnp.float32), axis=(2, 3))
    nc = packed["num_classes"]

    def cos(x):
        sumsq = jnp.sum(x * x, axis=-1, keepdims=True)
        xn = x * jax.lax.rsqrt(jnp.maximum(sumsq, EPS * EPS))
        return jnp.dot(xn, xn.T, preferred_element_type=jnp.float32)

    def agbn(x, cs, w, g, be):
        adj = jnp.where(cs >= threshold, cs, 0.0)
        adj = adj / jnp.maximum(jnp.sum(adj, axis=-1, keepdims=True), EPS)
        h = jnp.dot(adj, x, preferred_element_type=jnp.float32)
        h = jnp.dot(h.astype(jnp.bfloat16), w,
                    preferred_element_type=jnp.float32)
        mu = jnp.mean(h, axis=0, keepdims=True)
        var = jnp.mean((h - mu) ** 2, axis=0, keepdims=True)
        return (h - mu) * jax.lax.rsqrt(var + BN_EPS) * g + be

    x = feat
    x = agbn(x, cos(x), packed["w1"], packed["g1"], packed["be1"])
    x = jnp.where(x > 0, x, LEAKY_SLOPE * x)
    x = agbn(x, cos(x), packed["w2"], packed["g2"], packed["be2"])
    out = jnp.dot(x.astype(jnp.bfloat16), packed["wfc"],
                  preferred_element_type=jnp.float32) + packed["bfc"]
    return out[:, :nc], x


if __name__ == "__main__":
    key = jax.random.PRNGKey(0)
    k_x, k_p = jax.random.split(key)

    # Small shapes consistent with the forward: fc_in_dim scaled 2048 -> 128.
    B, C, H, W = 8, 128, 4, 4
    NUM_CLASSES = 10

    x = jax.random.normal(k_x, (B, C, H, W), jnp.float32)   # NCHW backbone features
    params = init_params(k_p, C, NUM_CLASSES)
    packed = pack_params(params)                  # one-time prep, not per-call
    jax.block_until_ready(packed["w1"])

    out, feat = res152_feature_forward(x, packed, phase=1, threshold=0.5)
    jax.block_until_ready((out, feat))

    assert out.shape == (B, NUM_CLASSES) and out.dtype == jnp.float32
    assert feat.shape == (B, C) and feat.dtype == jnp.float32

    ref_out, ref_feat = _reference_forward(x, packed, 0.5)
    assert jnp.allclose(out, ref_out, atol=5e-2, rtol=5e-2), "logits mismatch"
    assert jnp.allclose(feat, ref_feat, atol=5e-2, rtol=5e-2), "features mismatch"

    print("KERNEL_OK")
</pallas_src>

<mosaic_0001>
module attributes {stable_mosaic.version = 11 : i64} {
  func.func @res152_head_kernel(%arg0: memref<1x1xf32, #tpu.memory_space<smem>>, %arg1: memref<8x128xf32, #tpu.memory_space<vmem>>, %arg2: memref<1x128xf32, #tpu.memory_space<vmem>>, %arg3: memref<1x128xf32, #tpu.memory_space<vmem>>, %arg4: memref<1x128xf32, #tpu.memory_space<vmem>>, %arg5: memref<1x128xf32, #tpu.memory_space<vmem>>, %arg6: memref<1x128xf32, #tpu.memory_space<vmem>>, %arg7: memref<128x128xbf16, #tpu.memory_space<any>>, %arg8: memref<128x128xbf16, #tpu.memory_space<any>>, %arg9: memref<128x128xbf16, #tpu.memory_space<any>>, %arg10: memref<8x128xf32, #tpu.memory_space<vmem>>, %arg11: memref<8x128xf32, #tpu.memory_space<vmem>>, %arg12: memref<128x128xbf16, #tpu.memory_space<vmem>>, %arg13: memref<128x128xbf16, #tpu.memory_space<vmem>>, %arg14: memref<128x128xbf16, #tpu.memory_space<vmem>>, %arg15: memref<3x!tpu.dma_semaphore, #tpu.memory_space<semaphore_mem>>) attributes {dimension_semantics = [], scalar_prefetch = 0 : i64, scratch_operands = 4 : i64, tpu.core_type = #tpu.core_type<tc>} {
    %c0_i32 = arith.constant 0 : i32
    %0 = tpu.memref_slice %arg15[%c0_i32] : memref<3x!tpu.dma_semaphore, #tpu.memory_space<semaphore_mem>> -> memref<1x!tpu.dma_semaphore, #tpu.memory_space<semaphore_mem>>
    %1 = tpu.memref_squeeze %0 : memref<1x!tpu.dma_semaphore, #tpu.memory_space<semaphore_mem>> -> memref<!tpu.dma_semaphore, #tpu.memory_space<semaphore_mem>>
    tpu.enqueue_dma source(%arg7 : memref<128x128xbf16, #tpu.memory_space<any>>) target(%arg12 : memref<128x128xbf16, #tpu.memory_space<vmem>>) target_semaphore(%1 : memref<!tpu.dma_semaphore, #tpu.memory_space<semaphore_mem>>)
    %c1_i32 = arith.constant 1 : i32
    %2 = tpu.memref_slice %arg15[%c1_i32] : memref<3x!tpu.dma_semaphore, #tpu.memory_space<semaphore_mem>> -> memref<1x!tpu.dma_semaphore, #tpu.memory_space<semaphore_mem>>
    %3 = tpu.memref_squeeze %2 : memref<1x!tpu.dma_semaphore, #tpu.memory_space<semaphore_mem>> -> memref<!tpu.dma_semaphore, #tpu.memory_space<semaphore_mem>>
    tpu.enqueue_dma source(%arg8 : memref<128x128xbf16, #tpu.memory_space<any>>) target(%arg13 : memref<128x128xbf16, #tpu.memory_space<vmem>>) target_semaphore(%3 : memref<!tpu.dma_semaphore, #tpu.memory_space<semaphore_mem>>)
    %c2_i32 = arith.constant 2 : i32
    %4 = tpu.memref_slice %arg15[%c2_i32] : memref<3x!tpu.dma_semaphore, #tpu.memory_space<semaphore_mem>> -> memref<1x!tpu.dma_semaphore, #tpu.memory_space<semaphore_mem>>
    %5 = tpu.memref_squeeze %4 : memref<1x!tpu.dma_semaphore, #tpu.memory_space<semaphore_mem>> -> memref<!tpu.dma_semaphore, #tpu.memory_space<semaphore_mem>>
    tpu.enqueue_dma source(%arg9 : memref<128x128xbf16, #tpu.memory_space<any>>) target(%arg14 : memref<128x128xbf16, #tpu.memory_space<vmem>>) target_semaphore(%5 : memref<!tpu.dma_semaphore, #tpu.memory_space<semaphore_mem>>)
    %c0 = arith.constant 0 : index
    %c0_0 = arith.constant 0 : index
    %6 = memref.load %arg0[%c0, %c0_0] : memref<1x1xf32, #tpu.memory_space<smem>>
    %c0_1 = arith.constant 0 : index
    %c0_2 = arith.constant 0 : index
    %7 = vector.load %arg1[%c0_1, %c0_2] : memref<8x128xf32, #tpu.memory_space<vmem>>, vector<8x128xf32>
    %8 = arith.mulf %7, %7 : vector<8x128xf32>
    %cst = arith.constant dense<0.000000e+00> : vector<8xf32>
    %9 = vector.multi_reduction <add>, %8, %cst [1] : vector<8x128xf32> to vector<8xf32>
    %10 = vector.shape_cast %9 : vector<8xf32> to vector<8x1xf32>
    %cst_3 = arith.constant 1.000000e-16 : f32
    %11 = vector.broadcast %cst_3 : f32 to vector<8x1xf32>
    %12 = arith.maximumf %10, %11 : vector<8x1xf32>
    %13 = math.rsqrt %12 : vector<8x1xf32>
    %14 = vector.broadcast %13 : vector<8x1xf32> to vector<8x128xf32>
    %15 = arith.mulf %7, %14 : vector<8x128xf32>
    %cst_4 = arith.constant dense<0.000000e+00> : vector<8x8xf32>
    %16 = tpu.matmul %15, %15, %cst_4 {dimension_numbers = #tpu.dot_dimension_numbers<[1], [1], [0], [0], [0, 0, 1, 0], [], []>} : vector<8x128xf32>, vector<8x128xf32>, vector<8x8xf32> -> vector<8x8xf32>
    %17 = vector.broadcast %6 : f32 to vector<8x8xf32>
    %18 = arith.cmpf oge, %16, %17 : vector<8x8xf32>
    %cst_5 = arith.constant 0.000000e+00 : f32
    %19 = vector.broadcast %cst_5 : f32 to vector<8x8xf32>
    %20 = arith.select %18, %16, %19 : vector<8x8xi1>, vector<8x8xf32>
    %cst_6 = arith.constant dense<0.000000e+00> : vector<8xf32>
    %21 = vector.multi_reduction <add>, %20, %cst_6 [1] : vector<8x8xf32> to vector<8xf32>
    %22 = vector.shape_cast %21 : vector<8xf32> to vector<8x1xf32>
    %cst_7 = arith.constant 9.99999993E-9 : f32
    %23 = vector.broadcast %cst_7 : f32 to vector<8x1xf32>
    %24 = arith.maximumf %22, %23 : vector<8x1xf32>
    %25 = vector.broadcast %24 : vector<8x1xf32> to vector<8x8xf32>
    %26 = arith.divf %20, %25 : vector<8x8xf32>
    %cst_8 = arith.constant dense<0.000000e+00> : vector<8x128xf32>
    %27 = tpu.matmul %26, %7, %cst_8 {dimension_numbers = #tpu.dot_dimension_numbers<[1], [0], [0], [1], [0, 0, 1, 1], [], []>} : vector<8x8xf32>, vector<8x128xf32>, vector<8x128xf32> -> vector<8x128xf32>
    %c0_i32_9 = arith.constant 0 : i32
    %28 = tpu.memref_slice %arg15[%c0_i32_9] : memref<3x!tpu.dma_semaphore, #tpu.memory_space<semaphore_mem>> -> memref<1x!tpu.dma_semaphore, #tpu.memory_space<semaphore_mem>>
    %29 = tpu.memref_squeeze %28 : memref<1x!tpu.dma_semaphore, #tpu.memory_space<semaphore_mem>> -> memref<!tpu.dma_semaphore, #tpu.memory_space<semaphore_mem>>
    tpu.wait_dma2 semaphore(%29 : memref<!tpu.dma_semaphore, #tpu.memory_space<semaphore_mem>>) src(%arg7 : memref<128x128xbf16, #tpu.memory_space<any>>) dst(%arg12 : memref<128x128xbf16, #tpu.memory_space<vmem>>)
    %30 = arith.truncf %27 : vector<8x128xf32> to vector<8x128xbf16>
    %c0_10 = arith.constant 0 : index
    %c0_11 = arith.constant 0 : index
    %31 = vector.load %arg12[%c0_10, %c0_11] : memref<128x128xbf16, #tpu.memory_space<vmem>>, vector<128x128xbf16>
    %cst_12 = arith.constant dense<0.000000e+00> : vector<8x128xf32>
    %32 = tpu.matmul %30, %31, %cst_12 {dimension_numbers = #tpu.dot_dimension_numbers<[1], [0], [0], [1], [0, 0, 1, 1], [], []>} : vector<8x128xbf16>, vector<128x128xbf16>, vector<8x128xf32> -> vector<8x128xf32>
    %c0_13 = arith.constant 0 : index
    %c0_14 = arith.constant 0 : index
    %33 = vector.load %arg2[%c0_13, %c0_14] : memref<1x128xf32, #tpu.memory_space<vmem>>, vector<1x128xf32>
    %c0_15 = arith.constant 0 : index
    %c0_16 = arith.constant 0 : index
    %34 = vector.load %arg3[%c0_15, %c0_16] : memref<1x128xf32, #tpu.memory_space<vmem>>, vector<1x128xf32>
    %cst_17 = arith.constant dense<0.000000e+00> : vector<128xf32>
    %35 = vector.multi_reduction <add>, %32, %cst_17 [0] : vector<8x128xf32> to vector<128xf32>
    %36 = vector.shape_cast %35 : vector<128xf32> to vector<1x128xf32>
    %cst_18 = arith.constant 8.000000e+00 : f32
    %37 = vector.broadcast %cst_18 : f32 to vector<1x128xf32>
    %38 = arith.divf %36, %37 : vector<1x128xf32>
    %39 = vector.broadcast %38 : vector<1x128xf32> to vector<8x128xf32>
    %40 = arith.subf %32, %39 : vector<8x128xf32>
    %41 = arith.mulf %40, %40 : vector<8x128xf32>
    %cst_19 = arith.constant dense<0.000000e+00> : vector<128xf32>
    %42 = vector.multi_reduction <add>, %41, %cst_19 [0] : vector<8x128xf32> to vector<128xf32>
    %43 = vector.shape_cast %42 : vector<128xf32> to vector<1x128xf32>
    %cst_20 = arith.constant 8.000000e+00 : f32
    %44 = vector.broadcast %cst_20 : f32 to vector<1x128xf32>
    %45 = arith.divf %43, %44 : vector<1x128xf32>
    %46 = vector.broadcast %38 : vector<1x128xf32> to vector<8x128xf32>
    %47 = arith.subf %32, %46 : vector<8x128xf32>
    %cst_21 = arith.constant 9.99999974E-6 : f32
    %48 = vector.broadcast %cst_21 : f32 to vector<1x128xf32>
    %49 = arith.addf %45, %48 : vector<1x128xf32>
    %50 = math.rsqrt %49 : vector<1x128xf32>
    %51 = vector.broadcast %50 : vector<1x128xf32> to vector<8x128xf32>
    %52 = arith.mulf %47, %51 : vector<8x128xf32>
    %53 = vector.broadcast %33 : vector<1x128xf32> to vector<8x128xf32>
    %54 = arith.mulf %52, %53 : vector<8x128xf32>
    %55 = vector.broadcast %34 : vector<1x128xf32> to vector<8x128xf32>
    %56 = arith.addf %54, %55 : vector<8x128xf32>
    %cst_22 = arith.constant 0.000000e+00 : f32
    %57 = vector.broadcast %cst_22 : f32 to vector<8x128xf32>
    %58 = arith.cmpf ogt, %56, %57 : vector<8x128xf32>
    %cst_23 = arith.constant 2.000000e-01 : f32
    %59 = vector.broadcast %cst_23 : f32 to vector<8x128xf32>
    %60 = arith.mulf %59, %56 : vector<8x128xf32>
    %61 = arith.select %58, %56, %60 : vector<8x128xi1>, vector<8x128xf32>
    %62 = arith.mulf %61, %61 : vector<8x128xf32>
    %cst_24 = arith.constant dense<0.000000e+00> : vector<8xf32>
    %63 = vector.multi_reduction <add>, %62, %cst_24 [1] : vector<8x128xf32> to vector<8xf32>
    %64 = vector.shape_cast %63 : vector<8xf32> to vector<8x1xf32>
    %cst_25 = arith.constant 1.000000e-16 : f32
    %65 = vector.broadcast %cst_25 : f32 to vector<8x1xf32>
    %66 = arith.maximumf %64, %65 : vector<8x1xf32>
    %67 = math.rsqrt %66 : vector<8x1xf32>
    %68 = vector.broadcast %67 : vector<8x1xf32> to vector<8x128xf32>
    %69 = arith.mulf %61, %68 : vector<8x128xf32>
    %cst_26 = arith.constant dense<0.000000e+00> : vector<8x8xf32>
    %70 = tpu.matmul %69, %69, %cst_26 {dimension_numbers = #tpu.dot_dimension_numbers<[1], [1], [0], [0], [0, 0, 1, 0], [], []>} : vector<8x128xf32>, vector<8x128xf32>, vector<8x8xf32> -> vector<8x8xf32>
    %71 = vector.broadcast %6 : f32 to vector<8x8xf32>
    %72 = arith.cmpf oge, %70, %71 : vector<8x8xf32>
    %cst_27 = arith.constant 0.000000e+00 : f32
    %73 = vector.broadcast %cst_27 : f32 to vector<8x8xf32>
    %74 = arith.select %72, %70, %73 : vector<8x8xi1>, vector<8x8xf32>
    %cst_28 = arith.constant dense<0.000000e+00> : vector<8xf32>
    %75 = vector.multi_reduction <add>, %74, %cst_28 [1] : vector<8x8xf32> to vector<8xf32>
    %76 = vector.shape_cast %75 : vector<8xf32> to vector<8x1xf32>
    %cst_29 = arith.constant 9.99999993E-9 : f32
    %77 = vector.broadcast %cst_29 : f32 to vector<8x1xf32>
    %78 = arith.maximumf %76, %77 : vector<8x1xf32>
    %79 = vector.broadcast %78 : vector<8x1xf32> to vector<8x8xf32>
    %80 = arith.divf %74, %79 : vector<8x8xf32>
    %cst_30 = arith.constant dense<0.000000e+00> : vector<8x128xf32>
    %81 = tpu.matmul %80, %61, %cst_30 {dimension_numbers = #tpu.dot_dimension_numbers<[1], [0], [0], [1], [0, 0, 1, 1], [], []>} : vector<8x8xf32>, vector<8x128xf32>, vector<8x128xf32> -> vector<8x128xf32>
    %c1_i32_31 = arith.constant 1 : i32
    %82 = tpu.memref_slice %arg15[%c1_i32_31] : memref<3x!tpu.dma_semaphore, #tpu.memory_space<semaphore_mem>> -> memref<1x!tpu.dma_semaphore, #tpu.memory_space<semaphore_mem>>
    %83 = tpu.memref_squeeze %82 : memref<1x!tpu.dma_semaphore, #tpu.memory_space<semaphore_mem>> -> memref<!tpu.dma_semaphore, #tpu.memory_space<semaphore_mem>>
    tpu.wait_dma2 semaphore(%83 : memref<!tpu.dma_semaphore, #tpu.memory_space<semaphore_mem>>) src(%arg8 : memref<128x128xbf16, #tpu.memory_space<any>>) dst(%arg13 : memref<128x128xbf16, #tpu.memory_space<vmem>>)
    %84 = arith.truncf %81 : vector<8x128xf32> to vector<8x128xbf16>
    %c0_32 = arith.constant 0 : index
    %c0_33 = arith.constant 0 : index
    %85 = vector.load %arg13[%c0_32, %c0_33] : memref<128x128xbf16, #tpu.memory_space<vmem>>, vector<128x128xbf16>
    %cst_34 = arith.constant dense<0.000000e+00> : vector<8x128xf32>
    %86 = tpu.matmul %84, %85, %cst_34 {dimension_numbers = #tpu.dot_dimension_numbers<[1], [0], [0], [1], [0, 0, 1, 1], [], []>} : vector<8x128xbf16>, vector<128x128xbf16>, vector<8x128xf32> -> vector<8x128xf32>
    %c0_35 = arith.constant 0 : index
    %c0_36 = arith.constant 0 : index
    %87 = vector.load %arg4[%c0_35, %c0_36] : memref<1x128xf32, #tpu.memory_space<vmem>>, vector<1x128xf32>
    %c0_37 = arith.constant 0 : index
    %c0_38 = arith.constant 0 : index
    %88 = vector.load %arg5[%c0_37, %c0_38] : memref<1x128xf32, #tpu.memory_space<vmem>>, vector<1x128xf32>
    %cst_39 = arith.constant dense<0.000000e+00> : vector<128xf32>
    %89 = vector.multi_reduction <add>, %86, %cst_39 [0] : vector<8x128xf32> to vector<128xf32>
    %90 = vector.shape_cast %89 : vector<128xf32> to vector<1x128xf32>
    %cst_40 = arith.constant 8.000000e+00 : f32
    %91 = vector.broadcast %cst_40 : f32 to vector<1x128xf32>
    %92 = arith.divf %90, %91 : vector<1x128xf32>
    %93 = vector.broadcast %92 : vector<1x128xf32> to vector<8x128xf32>
    %94 = arith.subf %86, %93 : vector<8x128xf32>
    %95 = arith.mulf %94, %94 : vector<8x128xf32>
    %cst_41 = arith.constant dense<0.000000e+00> : vector<128xf32>
    %96 = vector.multi_reduction <add>, %95, %cst_41 [0] : vector<8x128xf32> to vector<128xf32>
    %97 = vector.shape_cast %96 : vector<128xf32> to vector<1x128xf32>
    %cst_42 = arith.constant 8.000000e+00 : f32
    %98 = vector.broadcast %cst_42 : f32 to vector<1x128xf32>
    %99 = arith.divf %97, %98 : vector<1x128xf32>
    %100 = vector.broadcast %92 : vector<1x128xf32> to vector<8x128xf32>
    %101 = arith.subf %86, %100 : vector<8x128xf32>
    %cst_43 = arith.constant 9.99999974E-6 : f32
    %102 = vector.broadcast %cst_43 : f32 to vector<1x128xf32>
    %103 = arith.addf %99, %102 : vector<1x128xf32>
    %104 = math.rsqrt %103 : vector<1x128xf32>
    %105 = vector.broadcast %104 : vector<1x128xf32> to vector<8x128xf32>
    %106 = arith.mulf %101, %105 : vector<8x128xf32>
    %107 = vector.broadcast %87 : vector<1x128xf32> to vector<8x128xf32>
    %108 = arith.mulf %106, %107 : vector<8x128xf32>
    %109 = vector.broadcast %88 : vector<1x128xf32> to vector<8x128xf32>
    %110 = arith.addf %108, %109 : vector<8x128xf32>
    %c2_i32_44 = arith.constant 2 : i32
    %111 = tpu.memref_slice %arg15[%c2_i32_44] : memref<3x!tpu.dma_semaphore, #tpu.memory_space<semaphore_mem>> -> memref<1x!tpu.dma_semaphore, #tpu.memory_space<semaphore_mem>>
    %112 = tpu.memref_squeeze %111 : memref<1x!tpu.dma_semaphore, #tpu.memory_space<semaphore_mem>> -> memref<!tpu.dma_semaphore, #tpu.memory_space<semaphore_mem>>
    tpu.wait_dma2 semaphore(%112 : memref<!tpu.dma_semaphore, #tpu.memory_space<semaphore_mem>>) src(%arg9 : memref<128x128xbf16, #tpu.memory_space<any>>) dst(%arg14 : memref<128x128xbf16, #tpu.memory_space<vmem>>)
    %113 = arith.truncf %110 : vector<8x128xf32> to vector<8x128xbf16>
    %c0_45 = arith.constant 0 : index
    %c0_46 = arith.constant 0 : index
    %114 = vector.load %arg14[%c0_45, %c0_46] : memref<128x128xbf16, #tpu.memory_space<vmem>>, vector<128x128xbf16>
    %cst_47 = arith.constant dense<0.000000e+00> : vector<8x128xf32>
    %115 = tpu.matmul %113, %114, %cst_47 {dimension_numbers = #tpu.dot_dimension_numbers<[1], [0], [0], [1], [0, 0, 1, 1], [], []>} : vector<8x128xbf16>, vector<128x128xbf16>, vector<8x128xf32> -> vector<8x128xf32>
    %c0_48 = arith.constant 0 : index
    %c0_49 = arith.constant 0 : index
    %116 = vector.load %arg6[%c0_48, %c0_49] : memref<1x128xf32, #tpu.memory_space<vmem>>, vector<1x128xf32>
    %117 = vector.broadcast %116 : vector<1x128xf32> to vector<8x128xf32>
    %118 = arith.addf %115, %117 : vector<8x128xf32>
    %c0_50 = arith.constant 0 : index
    %c0_51 = arith.constant 0 : index
    %119 = vector.load %arg10[%c0_50, %c0_51] : memref<8x128xf32, #tpu.memory_space<vmem>>, vector<8x128xf32>
    tpu.vector_store %arg10[%c0_50, %c0_51], %118 {strides = array<i32>} : memref<8x128xf32, #tpu.memory_space<vmem>>, vector<8x128xf32>,
    %c0_52 = arith.constant 0 : index
    %c0_53 = arith.constant 0 : index
    %120 = vector.load %arg11[%c0_52, %c0_53] : memref<8x128xf32, #tpu.memory_space<vmem>>, vector<8x128xf32>
    tpu.vector_store %arg11[%c0_52, %c0_53], %110 {strides = array<i32>} : memref<8x128xf32, #tpu.memory_space<vmem>>, vector<8x128xf32>,
    return
  }
}

</mosaic_0001>

<llo_original>
// kernel: tpu_custom_call.1
$region0: #{tpu_custom_call.1}
  #allocation0 [shape = 'u32[]', space=smem, size = 0x4, offset = 0x4, fixed_abs, tag = 'smem constant byte address 0x4 - core index']
  #allocation1 [shape = 'u32[144,128]{1,0:T(1,128)}', space=vmem, size = 0x12000, scoped, tag = 'internal scratch']
  #allocation2 [shape = 'bf16[128,128]{1,0:T(8,128)(2,1)}', space=vmem, size = 0x8000, scoped, tag = 'scratch operand']
  #allocation3 [shape = 'bf16[128,128]{1,0:T(8,128)(2,1)}', space=vmem, size = 0x8000, scoped, tag = 'scratch operand']
  #allocation4 [shape = 'bf16[128,128]{1,0:T(8,128)(2,1)}', space=vmem, size = 0x8000, scoped, tag = 'scratch operand']
  #allocation5 [shape = 's32[3]{0}', space=sflag, size = 0xc, scoped, tag = 'scratch operand']
  #allocation6 [shape = 'f32[1,1]{1,0:T(1,128)S(6)}', space=smem, size = 0x200, scoped, tag = 'scoped memory for tpu_custom_call.1']
  #allocation13 [shape = 's32[]', space=sflag, size = 0x4, offset = 0, fixed_abs, tag = 'sflag constant byte address 0x0 - dummy sync flag']
  #allocation14 [shape = 's32[]', space=sflag, size = 0x4, offset = 0, fixed_abs, tag = 'sflag constant byte address 0x0 - dummy sync flag']
  #allocation15 [shape = 'u32[]', space=smem, size = 0x4, offset = 0x44, fixed_abs, tag = 'smem constant byte address 0x44 - assertion arg 0']
  #allocation16 [shape = 'u32[]', space=smem, size = 0x4, offset = 0x48, fixed_abs, tag = 'smem constant byte address 0x48 - assertion arg 1']
  #allocation17 [shape = 's32[]', space=sflag, size = 0x4, offset = 0, fixed_abs, tag = 'sflag constant byte address 0x0 - dummy sync flag']
  #allocation18 [shape = 's32[]', space=sflag, size = 0x4, offset = 0, fixed_abs, tag = 'sflag constant byte address 0x0 - dummy sync flag']
  #allocation19 [shape = 's32[]', space=sflag, size = 0x4, offset = 0, fixed_abs, tag = 'sflag constant byte address 0x0 - dummy sync flag']
  #allocation20 [shape = 's32[]', space=sflag, size = 0x4, offset = 0, fixed_abs, tag = 'sflag constant byte address 0x0 - dummy sync flag']
  %s0 = inlined_call_operand.<no memory space> [shape: f32[1,1], index: 0, kind: input, shape index: {}]
  %s1 = inlined_call_operand.hbm [shape: f32[8,128], index: 1, kind: input, shape index: {}]
  %s2 = inlined_call_operand.vmem [shape: f32[1,128], index: 2, kind: input, shape index: {}]
  %s3 = inlined_call_operand.vmem [shape: f32[1,128], index: 3, kind: input, shape index: {}]
  %s4 = inlined_call_operand.vmem [shape: f32[1,128], index: 4, kind: input, shape index: {}]
  %s5 = inlined_call_operand.vmem [shape: f32[1,128], index: 5, kind: input, shape index: {}]
  %s6 = inlined_call_operand.vmem [shape: f32[1,128], index: 6, kind: input, shape index: {}]
  %s7 = inlined_call_operand.hbm [shape: bf16[128,128], index: 7, kind: input, shape index: {}]
  %s8 = inlined_call_operand.hbm [shape: bf16[128,128], index: 8, kind: input, shape index: {}]
  %s9 = inlined_call_operand.hbm [shape: bf16[128,128], index: 9, kind: input, shape index: {}]
  %s10 = inlined_call_operand.hbm [shape: f32[8,128], index: 10, kind: output, shape index: {0}]
  %s11 = inlined_call_operand.hbm [shape: f32[8,128], index: 11, kind: output, shape index: {1}]
  %12 = xla_tuple %s10, %s11
  %s13 = sld [smem:[#allocation0]]
  $region62: #{tpu_custom_call.1} parent=0
    _
  %s15 = ssub.s32 1, %s13
  %s16 = scalar_select 0, %s15, %s13
  %17 = sst [smem:[#allocation6]] %s0
  $region1: #{tpu_custom_call.1} parent=0
    #allocation7 [shape = 'u8[4096]{0}', space=vmem, size = 0x1000, scoped, tag = 'input window, operand 1, single buffered']
    #allocation8 [shape = 's32[1]{0}', space=sflag, size = 0x4, scoped, tag = 'scoped memory for tpu_custom_call.1']
    #allocation9 [shape = 's32[1]{0}', space=sflag, size = 0x4, scoped, tag = 'scoped memory for tpu_custom_call.1']
    #allocation10 [shape = 'u8[4096]{0}', space=vmem, size = 0x1000, scoped, tag = 'output window, operand 0, single buffered']
    #allocation11 [shape = 'u8[4096]{0}', space=vmem, size = 0x1000, scoped, tag = 'output window, operand 1, single buffered']
    #allocation12 [shape = 's32[1]{0}', space=sflag, size = 0x4, scoped, tag = 'scoped memory for tpu_custom_call.1']
    %18 = vsyncpa [#allocation8], 0
    %19 = vsyncpa [#allocation9], 0
    %20 = vsyncpa [#allocation12], 0
    // Predicated region
    $region2: #{tpu_custom_call.1} parent=1 // pred_check
      _
    $region3: #{tpu_custom_call.1} parent=1 // pred_check_branch
      %22 = sbr.rel (0) target = $region5
    $region4: #{tpu_custom_call.1} parent=1 // pred_region
      _
    $region5: #{tpu_custom_call.1} parent=1 // pred_fallthru
      _
    // Predicated region
    $region6: #{tpu_custom_call.1} parent=1 // pred_check
      _
    $region7: #{tpu_custom_call.1} parent=1 // pred_check_branch
      %24 = sbr.rel (0) target = $region9
    $region8: #{tpu_custom_call.1} parent=1 // pred_region
      %s26 = ssub.s32 128, 128
      %27 = vsyncadd [#allocation8], %s26
      %s29 = sshll.u32 [#allocation7], 4
      %s30 = int_to_ptr.vmem [resolvable:$true] %s29
      %32 = dma.hbm_to_vmem [thread:$0]  %s1, 128, %s30, [#allocation8]
    $region9: #{tpu_custom_call.1} parent=1 // pred_fallthru
      _
    // Predicated region
    $region10: #{tpu_custom_call.1} parent=1 // pred_check
      _
    $region11: #{tpu_custom_call.1} parent=1 // pred_check_branch
      %34 = sbr.rel (0) target = $region13
    $region12: #{tpu_custom_call.1} parent=1 // pred_region
      _
    $region13: #{tpu_custom_call.1} parent=1 // pred_fallthru
      _
    // Predicated region
    $region14: #{tpu_custom_call.1} parent=1 // pred_check
      _
    $region15: #{tpu_custom_call.1} parent=1 // pred_check_branch
      %36 = sbr.rel (0) target = $region17
    $region16: #{tpu_custom_call.1} parent=1 // pred_region
      _
    $region17: #{tpu_custom_call.1} parent=1 // pred_fallthru
      _
    // Predicated region
    $region18: #{tpu_custom_call.1} parent=1 // pred_check
      _
    $region19: #{tpu_custom_call.1} parent=1 // pred_check_branch
      %38 = sbr.rel (0) target = $region21
    $region20: #{tpu_custom_call.1} parent=1 // pred_region
      _
    $region21: #{tpu_custom_call.1} parent=1 // pred_fallthru
      _
    // Predicated region
    $region22: #{tpu_custom_call.1} parent=1 // pred_check
      _
    $region23: #{tpu_custom_call.1} parent=1 // pred_check_branch
      %40 = sbr.rel (0) target = $region25
    $region24: #{tpu_custom_call.1} parent=1 // pred_region
      _
    $region25: #{tpu_custom_call.1} parent=1 // pred_fallthru
      _
    // Predicated region
    $region26: #{tpu_custom_call.1} parent=1 // pred_check
      _
    $region27: #{tpu_custom_call.1} parent=1 // pred_check_branch
      %42 = sbr.rel (0) target = $region29
    $region28: #{tpu_custom_call.1} parent=1 // pred_region
      _
    $region29: #{tpu_custom_call.1} parent=1 // pred_fallthru
      _
    // Predicated region
    $region30: #{tpu_custom_call.1} parent=1 // pred_check
      _
    $region31: #{tpu_custom_call.1} parent=1 // pred_check_branch
      %44 = sbr.rel (0) target = $region33
    $region32: #{tpu_custom_call.1} parent=1 // pred_region
      %45 = dma.done [#allocation8], 128
    $region33: #{tpu_custom_call.1} parent=1 // pred_fallthru
      _
    // Predicated region
    $region34: #{tpu_custom_call.1} parent=1 // pred_check
      _
    $region35: #{tpu_custom_call.1} parent=1 // pred_check_branch
      %48 = sbr.rel target = $region37
    $region36: #{tpu_custom_call.1} parent=1 // pred_region
      %49 = sst [smem:[#allocation15]] [#allocation14]
      %50 = sst [smem:[#allocation16]] [#allocation13]
    $region37: #{tpu_custom_call.1} parent=1 // pred_fallthru
      _
    %52 = shalt.err (0)
    %s54 = sshll.u32 [#allocation2], 4
    %s55 = int_to_ptr.vmem [resolvable:$true] %s54
    %57 = dma.hbm_to_vmem [thread:$0]  %s7, 1024, %s55, [#allocation5]
    %s58 = scalar_lea.sflag [#allocation5], 1
    // Predicated region
    $region38: #{tpu_custom_call.1} parent=1 // pred_check
      _
    $region39: #{tpu_custom_call.1} parent=1 // pred_check_branch
      %60 = sbr.rel target = $region41
    $region40: #{tpu_custom_call.1} parent=1 // pred_region
      %61 = sst [smem:[#allocation15]] [#allocation18]
      %62 = sst [smem:[#allocation16]] [#allocation17]
    $region41: #{tpu_custom_call.1} parent=1 // pred_fallthru
      _
    %64 = shalt.err (0)
    %s66 = sshll.u32 [#allocation3], 4
    %s67 = int_to_ptr.vmem [resolvable:$true] %s66
    %69 = dma.hbm_to_vmem [thread:$0]  %s8, 1024, %s67, %s58
    %s70 = scalar_lea.sflag [#allocation5], 2
    // Predicated region
    $region42: #{tpu_custom_call.1} parent=1 // pred_check
      _
    $region43: #{tpu_custom_call.1} parent=1 // pred_check_branch
      %72 = sbr.rel target = $region45
    $region44: #{tpu_custom_call.1} parent=1 // pred_region
      %73 = sst [smem:[#allocation15]] [#allocation20]
      %74 = sst [smem:[#allocation16]] [#allocation19]
    $region45: #{tpu_custom_call.1} parent=1 // pred_fallthru
      _
    %76 = shalt.err (0)
    %s78 = sshll.u32 [#allocation4], 4
    %s79 = int_to_ptr.vmem [resolvable:$true] %s78
    %81 = dma.hbm_to_vmem [thread:$0]  %s9, 1024, %s79, %s70
    %s82 = sld [smem:[#allocation6]]
    %v83 = vld [vmem:[#allocation7] sm:$0xff]
    %v84 = vmul.f32 %v83, %v83
    %85 = vadd.xlane.f32.xlu0 %v84
    %v86 = vpop.xlane.xlu0 %85
    %v87 = vmax.f32 %v86, 1e-16
    %v88 = vrsqrt.pop %v87
    %v89 = vmul.f32 %v83, %v88
    %90 = vmatprep.subr.mxu0 0.0
    %91 = vmatpush1.xpose.msra.mxu0 0.0
    %92 = vmatprep.subr.mxu0 0.0
    %93 = vmatpush1.xpose.msra.mxu0 0.0
    %94 = vmatprep.subr.mxu0 0.0
    %95 = vmatpush1.xpose.msra.mxu0 0.0
    %96 = vmatprep.subr.mxu0 0.0
    %97 = vmatpush1.xpose.msra.mxu0 0.0
    %98 = vmatprep.subr.mxu0 0.0
    %99 = vmatpush1.xpose.msra.mxu0 0.0
    %100 = vmatprep.subr.mxu0 0.0
    %101 = vmatpush1.xpose.msra.mxu0 0.0
    %102 = vmatprep.subr.mxu0 0.0
    %103 = vmatpush1.xpose.msra.mxu0 0.0
    %104 = vmatprep.subr.mxu0 0.0
    %105 = vmatpush1.xpose.msra.mxu0 0.0
    %106 = vmatprep.subr.mxu0 0.0
    %107 = vmatpush1.xpose.msra.mxu0 0.0
    %108 = vmatprep.subr.mxu0 0.0
    %109 = vmatpush1.xpose.msra.mxu0 0.0
    %110 = vmatprep.subr.mxu0 0.0
    %111 = vmatpush1.xpose.msra.mxu0 0.0
    %112 = vmatprep.subr.mxu0 0.0
    %113 = vmatpush1.xpose.msra.mxu0 0.0
    %114 = vmatprep.subr.mxu0 0.0
    %115 = vmatpush1.xpose.msra.mxu0 0.0
    %116 = vmatprep.subr.mxu0 0.0
    %117 = vmatpush1.xpose.msra.mxu0 0.0
    %118 = vmatprep.subr.mxu0 0.0
    %119 = vmatpush1.xpose.msra.mxu0 0.0
    %120 = vmatprep.subr.mxu0 0.0
    %121 = vmatpush1.xpose.msra.mxu0 %v89
    %122 = vmatprep.subr.mxu0 0.0
    %123 = vmatpush2.xpose.msra.mxu0 0.0
    %124 = vmatprep.subr.mxu0 0.0
    %125 = vmatpush2.xpose.msra.mxu0 0.0
    %126 = vmatprep.subr.mxu0 0.0
    %127 = vmatpush2.xpose.msra.mxu0 0.0
    %128 = vmatprep.subr.mxu0 0.0
    %129 = vmatpush2.xpose.msra.mxu0 0.0
    %130 = vmatprep.subr.mxu0 0.0
    %131 = vmatpush2.xpose.msra.mxu0 0.0
    %132 = vmatprep.subr.mxu0 0.0
    %133 = vmatpush2.xpose.msra.mxu0 0.0
    %134 = vmatprep.subr.mxu0 0.0
    %135 = vmatpush2.xpose.msra.mxu0 0.0
    %136 = vmatprep.subr.mxu0 0.0
    %137 = vmatpush2.xpose.msra.mxu0 0.0
    %138 = vmatprep.subr.mxu0 0.0
    %139 = vmatpush2.xpose.msra.mxu0 0.0
    %140 = vmatprep.subr.mxu0 0.0
    %141 = vmatpush2.xpose.msra.mxu0 0.0
    %142 = vmatprep.subr.mxu0 0.0
    %143 = vmatpush2.xpose.msra.mxu0 0.0
    %144 = vmatprep.subr.mxu0 0.0
    %145 = vmatpush2.xpose.msra.mxu0 0.0
    %146 = vmatprep.subr.mxu0 0.0
    %147 = vmatpush2.xpose.msra.mxu0 0.0
    %148 = vmatprep.subr.mxu0 0.0
    %149 = vmatpush2.xpose.msra.mxu0 0.0
    %150 = vmatprep.subr.mxu0 0.0
    %151 = vmatpush2.xpose.msra.mxu0 0.0
    %152 = vmatprep.subr.mxu0 0.0
    %153 = vmatpush2.xpose.msra.mxu0 0.0
    %154 = vmatprep.mubr.f32.mxu0 0.0
    %155 = vmatmul.mubr.f32.gmra.mxu0 %v89
    %v156 = vpop.f32.mrf.mxu0
    %v157 = vadd.f32 0.0, %v156
    %v158 = vpop.f32.mrf.mxu0
    %159 = vdwg.mxu0
    %v160 = vstv %s82
    %vm161 = vcmp.ge.f32.partialorder %v157, %v160
    %v162 = vsel %vm161, %v157, 0.0
    %vm163 = vcmask 64512
    %v164 = vsel %vm163, %v162, 0.0
    %165 = vadd.xlane.f32.xlu0 %v164
    %v166 = vpop.xlane.xlu0 %165
    %v167 = vmax.f32 %v166, 1e-08
    %v168 = vrcp.pop %v167
    %v169 = vmul.f32 %v162, %v168
    %v171 = vsel %vm163, %v169, 0
    %173 = vmatprep.subr.mxu0 0.0
    %174 = vmatpush1.msra.mxu0 0.0
    %175 = vmatprep.subr.mxu0 0.0
    %176 = vmatpush1.msra.mxu0 0.0
    %177 = vmatprep.subr.mxu0 0.0
    %178 = vmatpush1.msra.mxu0 0.0
    %179 = vmatprep.subr.mxu0 0.0
    %180 = vmatpush1.msra.mxu0 0.0
    %181 = vmatprep.subr.mxu0 0.0
    %182 = vmatpush1.msra.mxu0 0.0
    %183 = vmatprep.subr.mxu0 0.0
    %184 = vmatpush1.msra.mxu0 0.0
    %185 = vmatprep.subr.mxu0 0.0
    %186 = vmatpush1.msra.mxu0 0.0
    %187 = vmatprep.subr.mxu0 0.0
    %188 = vmatpush1.msra.mxu0 0.0
    %189 = vmatprep.subr.mxu0 0.0
    %190 = vmatpush1.msra.mxu0 0.0
    %191 = vmatprep.subr.mxu0 0.0
    %192 = vmatpush1.msra.mxu0 0.0
    %193 = vmatprep.subr.mxu0 0.0
    %194 = vmatpush1.msra.mxu0 0.0
    %195 = vmatprep.subr.mxu0 0.0
    %196 = vmatpush1.msra.mxu0 0.0
    %197 = vmatprep.subr.mxu0 0.0
    %198 = vmatpush1.msra.mxu0 0.0
    %199 = vmatprep.subr.mxu0 0.0
    %200 = vmatpush1.msra.mxu0 0.0
    %201 = vmatprep.subr.mxu0 0.0
    %202 = vmatpush1.msra.mxu0 0.0
    %203 = vmatprep.subr.mxu0 0.0
    %204 = vmatpush1.msra.mxu0 %v83
    %205 = vmatprep.subr.mxu0 0.0
    %206 = vmatpush2.msra.mxu0 0.0
    %207 = vmatprep.subr.mxu0 0.0
    %208 = vmatpush2.msra.mxu0 0.0
    %209 = vmatprep.subr.mxu0 0.0
    %210 = vmatpush2.msra.mxu0 0.0
    %211 = vmatprep.subr.mxu0 0.0
    %212 = vmatpush2.msra.mxu0 0.0
    %213 = vmatprep.subr.mxu0 0.0
    %214 = vmatpush2.msra.mxu0 0.0
    %215 = vmatprep.subr.mxu0 0.0
    %216 = vmatpush2.msra.mxu0 0.0
    %217 = vmatprep.subr.mxu0 0.0
    %218 = vmatpush2.msra.mxu0 0.0
    %219 = vmatprep.subr.mxu0 0.0
    %220 = vmatpush2.msra.mxu0 0.0
    %221 = vmatprep.subr.mxu0 0.0
    %222 = vmatpush2.msra.mxu0 0.0
    %223 = vmatprep.subr.mxu0 0.0
    %224 = vmatpush2.msra.mxu0 0.0
    %225 = vmatprep.subr.mxu0 0.0
    %226 = vmatpush2.msra.mxu0 0.0
    %227 = vmatprep.subr.mxu0 0.0
    %228 = vmatpush2.msra.mxu0 0.0
    %229 = vmatprep.subr.mxu0 0.0
    %230 = vmatpush2.msra.mxu0 0.0
    %231 = vmatprep.subr.mxu0 0.0
    %232 = vmatpush2.msra.mxu0 0.0
    %233 = vmatprep.subr.mxu0 0.0
    %234 = vmatpush2.msra.mxu0 0.0
    %235 = vmatprep.subr.mxu0 0.0
    %236 = vmatpush2.msra.mxu0 0.0
    %237 = vmatprep.mubr.f32.mxu0 0.0
    %238 = vmatmul.mubr.f32.gmra.mxu0 %v171
    %v239 = vpop.f32.mrf.mxu0
    %v240 = vadd.f32 0.0, %v239
    %v241 = vpop.f32.mrf.mxu0
    %242 = vdwg.mxu0
    %s243 = smul.u32 4, 16
    %s244 = smul.u32 %s243, 1
    %s245 = sshll.u32 %s244, 4
    %246 = dma.done [#allocation5], %s245
    %v247 = vpack.c.bf16 %v240, %v240
    %v248 = vld [vmem:[#allocation2] sm:$0xf]
    %v249 = vld [vmem:[#allocation2 + $0x4] sm:$0xf]
    %v250 = vld [vmem:[#allocation2 + $0x8] sm:$0xf]
    %v251 = vld [vmem:[#allocation2 + $0xc] sm:$0xf]
    %v252 = vld [vmem:[#allocation2 + $0x10] sm:$0xf]
    %v253 = vld [vmem:[#allocation2 + $0x14] sm:$0xf]
    %v254 = vld [vmem:[#allocation2 + $0x18] sm:$0xf]
    %v255 = vld [vmem:[#allocation2 + $0x1c] sm:$0xf]
    %v256 = vld [vmem:[#allocation2 + $0x20] sm:$0xf]
    %v257 = vld [vmem:[#allocation2 + $0x24] sm:$0xf]
    %v258 = vld [vmem:[#allocation2 + $0x28] sm:$0xf]
    %v259 = vld [vmem:[#allocation2 + $0x2c] sm:$0xf]
    %v260 = vld [vmem:[#allocation2 + $0x30] sm:$0xf]
    %v261 = vld [vmem:[#allocation2 + $0x34] sm:$0xf]
    %v262 = vld [vmem:[#allocation2 + $0x38] sm:$0xf]
    %v263 = vld [vmem:[#allocation2 + $0x3c] sm:$0xf]
    %v280 = vunpack.c.l.b16 %v248
    %v281 = vunpack.c.l.b16 %v249
    %v282 = vunpack.c.l.b16 %v250
    %v283 = vunpack.c.l.b16 %v251
    %v284 = vunpack.c.l.b16 %v252
    %v285 = vunpack.c.l.b16 %v253
    %v286 = vunpack.c.l.b16 %v254
    %v287 = vunpack.c.l.b16 %v255
    %v288 = vunpack.c.l.b16 %v256
    %v289 = vunpack.c.l.b16 %v257
    %v290 = vunpack.c.l.b16 %v258
    %v291 = vunpack.c.l.b16 %v259
    %v292 = vunpack.c.l.b16 %v260
    %v293 = vunpack.c.l.b16 %v261
    %v294 = vunpack.c.l.b16 %v262
    %v295 = vunpack.c.l.b16 %v263
    %v296 = vpack.c.b16 %v281, %v280
    %v297 = vpack.c.b16 %v283, %v282
    %v298 = vpack.c.b16 %v285, %v284
    %v299 = vpack.c.b16 %v287, %v286
    %v300 = vpack.c.b16 %v289, %v288
    %v301 = vpack.c.b16 %v291, %v290
    %v302 = vpack.c.b16 %v293, %v292
    %v303 = vpack.c.b16 %v295, %v294
    %312 = vmatprep.subr.bf16.mxu0 0
    %313 = vmatpush1.bf16.msra.mxu0 %v303
    %314 = vmatprep.subr.bf16.mxu0 0
    %315 = vmatpush1.bf16.msra.mxu0 %v302
    %316 = vmatprep.subr.bf16.mxu0 0
    %317 = vmatpush1.bf16.msra.mxu0 %v301
    %318 = vmatprep.subr.bf16.mxu0 0
    %319 = vmatpush1.bf16.msra.mxu0 %v300
    %320 = vmatprep.subr.bf16.mxu0 0
    %321 = vmatpush1.bf16.msra.mxu0 %v299
    %322 = vmatprep.subr.bf16.mxu0 0
    %323 = vmatpush1.bf16.msra.mxu0 %v298
    %324 = vmatprep.subr.bf16.mxu0 0
    %325 = vmatpush1.bf16.msra.mxu0 %v297
    %326 = vmatprep.subr.bf16.mxu0 0
    %327 = vmatpush1.bf16.msra.mxu0 %v296
    %328 = vmatprep.subr.bf16.mxu0 0
    %329 = vmatpush2.bf16.msra.mxu0 0
    %330 = vmatprep.subr.bf16.mxu0 0
    %331 = vmatpush2.bf16.msra.mxu0 0
    %332 = vmatprep.subr.bf16.mxu0 0
    %333 = vmatpush2.bf16.msra.mxu0 0
    %334 = vmatprep.subr.bf16.mxu0 0
    %335 = vmatpush2.bf16.msra.mxu0 0
    %336 = vmatprep.subr.bf16.mxu0 0
    %337 = vmatpush2.bf16.msra.mxu0 0
    %338 = vmatprep.subr.bf16.mxu0 0
    %339 = vmatpush2.bf16.msra.mxu0 0
    %340 = vmatprep.subr.bf16.mxu0 0
    %341 = vmatpush2.bf16.msra.mxu0 0
    %342 = vmatprep.subr.bf16.mxu0 0
    %343 = vmatpush2.bf16.msra.mxu0 0
    %344 = vmatprep.mubr.bf16.mxu0 0
    %345 = vmatmul.mubr.bf16.gmra.mxu0 %v247
    %v346 = vpop.f32.mrf.mxu0
    %v347 = vadd.f32 0.0, %v346
    %v348 = vpop.f32.mrf.mxu0
    %v349 = vpop.f32.mrf.mxu0
    %v350 = vpop.f32.mrf.mxu0
    %351 = vdwg.mxu0
    %v352 = vld [vmem:[%s2] sm:$0x1]
    %v353 = vld [vmem:[%s3] sm:$0x1]
    %v354 = vrot.slane %v347, 4
    %v355 = vadd.f32 %v347, %v354
    %v356 = vrot.slane %v355, 2
    %v357 = vadd.f32 %v355, %v356
    %v358 = vrot.slane %v357, 1
    %v359 = vadd.f32 %v357, %v358
    %v360 = vrcp.pop 8.0
    %v361 = vmul.f32 %v359, %v360
    %v362 = vsub.f32 %v347, %v361
    %v363 = vmul.f32 %v362, %v362
    %v364 = vrot.slane %v363, 4
    %v365 = vadd.f32 %v363, %v364
    %v366 = vrot.slane %v365, 2
    %v367 = vadd.f32 %v365, %v366
    %v368 = vrot.slane %v367, 1
    %v369 = vadd.f32 %v367, %v368
    %v370 = vmul.f32 %v369, %v360
    %v371 = vadd.f32 %v370, 1e-05
    %v372 = vrsqrt.pop %v371
    %v373 = vmul.f32 %v362, %v372
    %v375 = vlaneseq
    %v376 = vshrl.u32 %v375, 7
    %v377 = vsub.s32 0, %v376
    %v378 = vrot.slane %v352, %v377
    %v380 = vmul.f32 %v373, %v378
    %v382 = vlaneseq
    %v383 = vshrl.u32 %v382, 7
    %v384 = vsub.s32 0, %v383
    %v385 = vrot.slane %v353, %v384
    %v387 = vadd.f32 %v380, %v385
    %vm388 = vcmp.gt.f32.partialorder %v387, 0.0
    %v389 = vmul.f32 %v387, 0.2
    %v390 = vsel %vm388, %v387, %v389
    %v391 = vmul.f32 %v390, %v390
    %392 = vadd.xlane.f32.xlu0 %v391
    %v393 = vpop.xlane.xlu0 %392
    %v394 = vmax.f32 %v393, 1e-16
    %v395 = vrsqrt.pop %v394
    %v396 = vmul.f32 %v390, %v395
    %397 = vmatprep.subr.mxu0 0.0
    %398 = vmatpush1.xpose.msra.mxu0 0.0
    %399 = vmatprep.subr.mxu0 0.0
    %400 = vmatpush1.xpose.msra.mxu0 0.0
    %401 = vmatprep.subr.mxu0 0.0
    %402 = vmatpush1.xpose.msra.mxu0 0.0
    %403 = vmatprep.subr.mxu0 0.0
    %404 = vmatpush1.xpose.msra.mxu0 0.0
    %405 = vmatprep.subr.mxu0 0.0
    %406 = vmatpush1.xpose.msra.mxu0 0.0
    %407 = vmatprep.subr.mxu0 0.0
    %408 = vmatpush1.xpose.msra.mxu0 0.0
    %409 = vmatprep.subr.mxu0 0.0
    %410 = vmatpush1.xpose.msra.mxu0 0.0
    %411 = vmatprep.subr.mxu0 0.0
    %412 = vmatpush1.xpose.msra.mxu0 0.0
    %413 = vmatprep.subr.mxu0 0.0
    %414 = vmatpush1.xpose.msra.mxu0 0.0
    %415 = vmatprep.subr.mxu0 0.0
    %416 = vmatpush1.xpose.msra.mxu0 0.0
    %417 = vmatprep.subr.mxu0 0.0
    %418 = vmatpush1.xpose.msra.mxu0 0.0
    %419 = vmatprep.subr.mxu0 0.0
    %420 = vmatpush1.xpose.msra.mxu0 0.0
    %421 = vmatprep.subr.mxu0 0.0
    %422 = vmatpush1.xpose.msra.mxu0 0.0
    %423 = vmatprep.subr.mxu0 0.0
    %424 = vmatpush1.xpose.msra.mxu0 0.0
    %425 = vmatprep.subr.mxu0 0.0
    %426 = vmatpush1.xpose.msra.mxu0 0.0
    %427 = vmatprep.subr.mxu0 0.0
    %428 = vmatpush1.xpose.msra.mxu0 %v396
    %429 = vmatprep.subr.mxu0 0.0
    %430 = vmatpush2.xpose.msra.mxu0 0.0
    %431 = vmatprep.subr.mxu0 0.0
    %432 = vmatpush2.xpose.msra.mxu0 0.0
    %433 = vmatprep.subr.mxu0 0.0
    %434 = vmatpush2.xpose.msra.mxu0 0.0
    %435 = vmatprep.subr.mxu0 0.0
    %436 = vmatpush2.xpose.msra.mxu0 0.0
    %437 = vmatprep.subr.mxu0 0.0
    %438 = vmatpush2.xpose.msra.mxu0 0.0
    %439 = vmatprep.subr.mxu0 0.0
    %440 = vmatpush2.xpose.msra.mxu0 0.0
    %441 = vmatprep.subr.mxu0 0.0
    %442 = vmatpush2.xpose.msra.mxu0 0.0
    %443 = vmatprep.subr.mxu0 0.0
    %444 = vmatpush2.xpose.msra.mxu0 0.0
    %445 = vmatprep.subr.mxu0 0.0
    %446 = vmatpush2.xpose.msra.mxu0 0.0
    %447 = vmatprep.subr.mxu0 0.0
    %448 = vmatpush2.xpose.msra.mxu0 0.0
    %449 = vmatprep.subr.mxu0 0.0
    %450 = vmatpush2.xpose.msra.mxu0 0.0
    %451 = vmatprep.subr.mxu0 0.0
    %452 = vmatpush2.xpose.msra.mxu0 0.0
    %453 = vmatprep.subr.mxu0 0.0
    %454 = vmatpush2.xpose.msra.mxu0 0.0
    %455 = vmatprep.subr.mxu0 0.0
    %456 = vmatpush2.xpose.msra.mxu0 0.0
    %457 = vmatprep.subr.mxu0 0.0
    %458 = vmatpush2.xpose.msra.mxu0 0.0
    %459 = vmatprep.subr.mxu0 0.0
    %460 = vmatpush2.xpose.msra.mxu0 0.0
    %461 = vmatprep.mubr.f32.mxu0 0.0
    %462 = vmatmul.mubr.f32.gmra.mxu0 %v396
    %v463 = vpop.f32.mrf.mxu0
    %v464 = vadd.f32 0.0, %v463
    %v465 = vpop.f32.mrf.mxu0
    %466 = vdwg.mxu0
    %vm467 = vcmp.ge.f32.partialorder %v464, %v160
    %v468 = vsel %vm467, %v464, 0.0
    %v469 = vsel %vm163, %v468, 0.0
    %470 = vadd.xlane.f32.xlu0 %v469
    %v471 = vpop.xlane.xlu0 %470
    %v472 = vmax.f32 %v471, 1e-08
    %v473 = vrcp.pop %v472
    %v474 = vmul.f32 %v468, %v473
    %v476 = vsel %vm163, %v474, 0
    %478 = vmatprep.subr.mxu0 0.0
    %479 = vmatpush1.msra.mxu0 0.0
    %480 = vmatprep.subr.mxu0 0.0
    %481 = vmatpush1.msra.mxu0 0.0
    %482 = vmatprep.subr.mxu0 0.0
    %483 = vmatpush1.msra.mxu0 0.0
    %484 = vmatprep.subr.mxu0 0.0
    %485 = vmatpush1.msra.mxu0 0.0
    %486 = vmatprep.subr.mxu0 0.0
    %487 = vmatpush1.msra.mxu0 0.0
    %488 = vmatprep.subr.mxu0 0.0
    %489 = vmatpush1.msra.mxu0 0.0
    %490 = vmatprep.subr.mxu0 0.0
    %491 = vmatpush1.msra.mxu0 0.0
    %492 = vmatprep.subr.mxu0 0.0
    %493 = vmatpush1.msra.mxu0 0.0
    %494 = vmatprep.subr.mxu0 0.0
    %495 = vmatpush1.msra.mxu0 0.0
    %496 = vmatprep.subr.mxu0 0.0
    %497 = vmatpush1.msra.mxu0 0.0
    %498 = vmatprep.subr.mxu0 0.0
    %499 = vmatpush1.msra.mxu0 0.0
    %500 = vmatprep.subr.mxu0 0.0
    %501 = vmatpush1.msra.mxu0 0.0
    %502 = vmatprep.subr.mxu0 0.0
    %503 = vmatpush1.msra.mxu0 0.0
    %504 = vmatprep.subr.mxu0 0.0
    %505 = vmatpush1.msra.mxu0 0.0
    %506 = vmatprep.subr.mxu0 0.0
    %507 = vmatpush1.msra.mxu0 0.0
    %508 = vmatprep.subr.mxu0 0.0
    %509 = vmatpush1.msra.mxu0 %v390
    %510 = vmatprep.subr.mxu0 0.0
    %511 = vmatpush2.msra.mxu0 0.0
    %512 = vmatprep.subr.mxu0 0.0
    %513 = vmatpush2.msra.mxu0 0.0
    %514 = vmatprep.subr.mxu0 0.0
    %515 = vmatpush2.msra.mxu0 0.0
    %516 = vmatprep.subr.mxu0 0.0
    %517 = vmatpush2.msra.mxu0 0.0
    %518 = vmatprep.subr.mxu0 0.0
    %519 = vmatpush2.msra.mxu0 0.0
    %520 = vmatprep.subr.mxu0 0.0
    %521 = vmatpush2.msra.mxu0 0.0
    %522 = vmatprep.subr.mxu0 0.0
    %523 = vmatpush2.msra.mxu0 0.0
    %524 = vmatprep.subr.mxu0 0.0
    %525 = vmatpush2.msra.mxu0 0.0
    %526 = vmatprep.subr.mxu0 0.0
    %527 = vmatpush2.msra.mxu0 0.0
    %528 = vmatprep.subr.mxu0 0.0
    %529 = vmatpush2.msra.mxu0 0.0
    %530 = vmatprep.subr.mxu0 0.0
    %531 = vmatpush2.msra.mxu0 0.0
    %532 = vmatprep.subr.mxu0 0.0
    %533 = vmatpush2.msra.mxu0 0.0
    %534 = vmatprep.subr.mxu0 0.0
    %535 = vmatpush2.msra.mxu0 0.0
    %536 = vmatprep.subr.mxu0 0.0
    %537 = vmatpush2.msra.mxu0 0.0
    %538 = vmatprep.subr.mxu0 0.0
    %539 = vmatpush2.msra.mxu0 0.0
    %540 = vmatprep.subr.mxu0 0.0
    %541 = vmatpush2.msra.mxu0 0.0
    %542 = vmatprep.mubr.f32.mxu0 0.0
    %543 = vmatmul.mubr.f32.gmra.mxu0 %v476
    %v544 = vpop.f32.mrf.mxu0
    %v545 = vadd.f32 0.0, %v544
    %v546 = vpop.f32.mrf.mxu0
    %547 = vdwg.mxu0
    %s548 = sshll.u32 %s244, 4
    %549 = dma.done %s58, %s548
    %v550 = vpack.c.bf16 %v545, %v545
    %v551 = vld [vmem:[#allocation3] sm:$0xf]
    %v552 = vld [vmem:[#allocation3 + $0x4] sm:$0xf]
    %v553 = vld [vmem:[#allocation3 + $0x8] sm:$0xf]
    %v554 = vld [vmem:[#allocation3 + $0xc] sm:$0xf]
    %v555 = vld [vmem:[#allocation3 + $0x10] sm:$0xf]
    %v556 = vld [vmem:[#allocation3 + $0x14] sm:$0xf]
    %v557 = vld [vmem:[#allocation3 + $0x18] sm:$0xf]
    %v558 = vld [vmem:[#allocation3 + $0x1c] sm:$0xf]
    %v559 = vld [vmem:[#allocation3 + $0x20] sm:$0xf]
    %v560 = vld [vmem:[#allocation3 + $0x24] sm:$0xf]
    %v561 = vld [vmem:[#allocation3 + $0x28] sm:$0xf]
    %v562 = vld [vmem:[#allocation3 + $0x2c] sm:$0xf]
    %v563 = vld [vmem:[#allocation3 + $0x30] sm:$0xf]
    %v564 = vld [vmem:[#allocation3 + $0x34] sm:$0xf]
    %v565 = vld [vmem:[#allocation3 + $0x38] sm:$0xf]
    %v566 = vld [vmem:[#allocation3 + $0x3c] sm:$0xf]
    %v583 = vunpack.c.l.b16 %v551
    %v584 = vunpack.c.l.b16 %v552
    %v585 = vunpack.c.l.b16 %v553
    %v586 = vunpack.c.l.b16 %v554
    %v587 = vunpack.c.l.b16 %v555
    %v588 = vunpack.c.l.b16 %v556
    %v589 = vunpack.c.l.b16 %v557
    %v590 = vunpack.c.l.b16 %v558
    %v591 = vunpack.c.l.b16 %v559
    %v592 = vunpack.c.l.b16 %v560
    %v593 = vunpack.c.l.b16 %v561
    %v594 = vunpack.c.l.b16 %v562
    %v595 = vunpack.c.l.b16 %v563
    %v596 = vunpack.c.l.b16 %v564
    %v597 = vunpack.c.l.b16 %v565
    %v598 = vunpack.c.l.b16 %v566
    %v599 = vpack.c.b16 %v584, %v583
    %v600 = vpack.c.b16 %v586, %v585
    %v601 = vpack.c.b16 %v588, %v587
    %v602 = vpack.c.b16 %v590, %v589
    %v603 = vpack.c.b16 %v592, %v591
    %v604 = vpack.c.b16 %v594, %v593
    %v605 = vpack.c.b16 %v596, %v595
    %v606 = vpack.c.b16 %v598, %v597
    %615 = vmatprep.subr.bf16.mxu0 0
    %616 = vmatpush1.bf16.msra.mxu0 %v606
    %617 = vmatprep.subr.bf16.mxu0 0
    %618 = vmatpush1.bf16.msra.mxu0 %v605
    %619 = vmatprep.subr.bf16.mxu0 0
    %620 = vmatpush1.bf16.msra.mxu0 %v604
    %621 = vmatprep.subr.bf16.mxu0 0
    %622 = vmatpush1.bf16.msra.mxu0 %v603
    %623 = vmatprep.subr.bf16.mxu0 0
    %624 = vmatpush1.bf16.msra.mxu0 %v602
    %625 = vmatprep.subr.bf16.mxu0 0
    %626 = vmatpush1.bf16.msra.mxu0 %v601
    %627 = vmatprep.subr.bf16.mxu0 0
    %628 = vmatpush1.bf16.msra.mxu0 %v600
    %629 = vmatprep.subr.bf16.mxu0 0
    %630 = vmatpush1.bf16.msra.mxu0 %v599
    %631 = vmatprep.subr.bf16.mxu0 0
    %632 = vmatpush2.bf16.msra.mxu0 0
    %633 = vmatprep.subr.bf16.mxu0 0
    %634 = vmatpush2.bf16.msra.mxu0 0
    %635 = vmatprep.subr.bf16.mxu0 0
    %636 = vmatpush2.bf16.msra.mxu0 0
    %637 = vmatprep.subr.bf16.mxu0 0
    %638 = vmatpush2.bf16.msra.mxu0 0
    %639 = vmatprep.subr.bf16.mxu0 0
    %640 = vmatpush2.bf16.msra.mxu0 0
    %641 = vmatprep.subr.bf16.mxu0 0
    %642 = vmatpush2.bf16.msra.mxu0 0
    %643 = vmatprep.subr.bf16.mxu0 0
    %644 = vmatpush2.bf16.msra.mxu0 0
    %645 = vmatprep.subr.bf16.mxu0 0
    %646 = vmatpush2.bf16.msra.mxu0 0
    %647 = vmatprep.mubr.bf16.mxu0 0
    %648 = vmatmul.mubr.bf16.gmra.mxu0 %v550
    %v649 = vpop.f32.mrf.mxu0
    %v650 = vadd.f32 0.0, %v649
    %v651 = vpop.f32.mrf.mxu0
    %v652 = vpop.f32.mrf.mxu0
    %v653 = vpop.f32.mrf.mxu0
    %654 = vdwg.mxu0
    %v655 = vld [vmem:[%s4] sm:$0x1]
    %v656 = vld [vmem:[%s5] sm:$0x1]
    %v657 = vrot.slane %v650, 4
    %v658 = vadd.f32 %v650, %v657
    %v659 = vrot.slane %v658, 2
    %v660 = vadd.f32 %v658, %v659
    %v661 = vrot.slane %v660, 1
    %v662 = vadd.f32 %v660, %v661
    %v663 = vmul.f32 %v662, %v360
    %v664 = vsub.f32 %v650, %v663
    %v665 = vmul.f32 %v664, %v664
    %v666 = vrot.slane %v665, 4
    %v667 = vadd.f32 %v665, %v666
    %v668 = vrot.slane %v667, 2
    %v669 = vadd.f32 %v667, %v668
    %v670 = vrot.slane %v669, 1
    %v671 = vadd.f32 %v669, %v670
    %v672 = vmul.f32 %v671, %v360
    %v673 = vadd.f32 %v672, 1e-05
    %v674 = vrsqrt.pop %v673
    %v675 = vmul.f32 %v664, %v674
    %v677 = vlaneseq
    %v678 = vshrl.u32 %v677, 7
    %v679 = vsub.s32 0, %v678
    %v680 = vrot.slane %v655, %v679
    %v682 = vmul.f32 %v675, %v680
    %v684 = vlaneseq
    %v685 = vshrl.u32 %v684, 7
    %v686 = vsub.s32 0, %v685
    %v687 = vrot.slane %v656, %v686
    %v689 = vadd.f32 %v682, %v687
    %s690 = sshll.u32 %s244, 4
    %691 = dma.done %s70, %s690
    %v692 = vpack.c.bf16 %v689, %v689
    %v693 = vld [vmem:[#allocation4] sm:$0xf]
    %v694 = vld [vmem:[#allocation4 + $0x4] sm:$0xf]
    %v695 = vld [vmem:[#allocation4 + $0x8] sm:$0xf]
    %v696 = vld [vmem:[#allocation4 + $0xc] sm:$0xf]
    %v697 = vld [vmem:[#allocation4 + $0x10] sm:$0xf]
    %v698 = vld [vmem:[#allocation4 + $0x14] sm:$0xf]
    %v699 = vld [vmem:[#allocation4 + $0x18] sm:$0xf]
    %v700 = vld [vmem:[#allocation4 + $0x1c] sm:$0xf]
    %v701 = vld [vmem:[#allocation4 + $0x20] sm:$0xf]
    %v702 = vld [vmem:[#allocation4 + $0x24] sm:$0xf]
    %v703 = vld [vmem:[#allocation4 + $0x28] sm:$0xf]
    %v704 = vld [vmem:[#allocation4 + $0x2c] sm:$0xf]
    %v705 = vld [vmem:[#allocation4 + $0x30] sm:$0xf]
    %v706 = vld [vmem:[#allocation4 + $0x34] sm:$0xf]
    %v707 = vld [vmem:[#allocation4 + $0x38] sm:$0xf]
    %v708 = vld [vmem:[#allocation4 + $0x3c] sm:$0xf]
    %v709 = vld [vmem:[%s6] sm:$0x1]
    %v711 = vlaneseq
    %v712 = vshrl.u32 %v711, 7
    %v713 = vsub.s32 0, %v712
    %v714 = vrot.slane %v709, %v713
    %v732 = vunpack.c.l.b16 %v693
    %v733 = vunpack.c.l.b16 %v694
    %v734 = vunpack.c.l.b16 %v695
    %v735 = vunpack.c.l.b16 %v696
    %v736 = vunpack.c.l.b16 %v697
    %v737 = vunpack.c.l.b16 %v698
    %v738 = vunpack.c.l.b16 %v699
    %v739 = vunpack.c.l.b16 %v700
    %v740 = vunpack.c.l.b16 %v701
    %v741 = vunpack.c.l.b16 %v702
    %v742 = vunpack.c.l.b16 %v703
    %v743 = vunpack.c.l.b16 %v704
    %v744 = vunpack.c.l.b16 %v705
    %v745 = vunpack.c.l.b16 %v706
    %v746 = vunpack.c.l.b16 %v707
    %v747 = vunpack.c.l.b16 %v708
    %v748 = vpack.c.b16 %v733, %v732
    %v749 = vpack.c.b16 %v735, %v734
    %v750 = vpack.c.b16 %v737, %v736
    %v751 = vpack.c.b16 %v739, %v738
    %v752 = vpack.c.b16 %v741, %v740
    %v753 = vpack.c.b16 %v743, %v742
    %v754 = vpack.c.b16 %v745, %v744
    %v755 = vpack.c.b16 %v747, %v746
    %764 = vmatprep.subr.bf16.mxu0 0
    %765 = vmatpush1.bf16.msra.mxu0 %v755
    %766 = vmatprep.subr.bf16.mxu0 0
    %767 = vmatpush1.bf16.msra.mxu0 %v754
    %768 = vmatprep.subr.bf16.mxu0 0
    %769 = vmatpush1.bf16.msra.mxu0 %v753
    %770 = vmatprep.subr.bf16.mxu0 0
    %771 = vmatpush1.bf16.msra.mxu0 %v752
    %772 = vmatprep.subr.bf16.mxu0 0
    %773 = vmatpush1.bf16.msra.mxu0 %v751
    %774 = vmatprep.subr.bf16.mxu0 0
    %775 = vmatpush1.bf16.msra.mxu0 %v750
    %776 = vmatprep.subr.bf16.mxu0 0
    %777 = vmatpush1.bf16.msra.mxu0 %v749
    %778 = vmatprep.subr.bf16.mxu0 0
    %779 = vmatpush1.bf16.msra.mxu0 %v748
    %780 = vmatprep.subr.bf16.mxu0 0
    %781 = vmatpush2.bf16.msra.mxu0 0
    %782 = vmatprep.subr.bf16.mxu0 0
    %783 = vmatpush2.bf16.msra.mxu0 0
    %784 = vmatprep.subr.bf16.mxu0 0
    %785 = vmatpush2.bf16.msra.mxu0 0
    %786 = vmatprep.subr.bf16.mxu0 0
    %787 = vmatpush2.bf16.msra.mxu0 0
    %788 = vmatprep.subr.bf16.mxu0 0
    %789 = vmatpush2.bf16.msra.mxu0 0
    %790 = vmatprep.subr.bf16.mxu0 0
    %791 = vmatpush2.bf16.msra.mxu0 0
    %792 = vmatprep.subr.bf16.mxu0 0
    %793 = vmatpush2.bf16.msra.mxu0 0
    %794 = vmatprep.subr.bf16.mxu0 0
    %795 = vmatpush2.bf16.msra.mxu0 0
    %796 = vmatprep.mubr.bf16.mxu0 0
    %797 = vmatmul.mubr.bf16.gmra.mxu0 %v692
    %v798 = vpop.f32.mrf.mxu0
    %v799 = vadd.f32 %v714, %v798
    %v800 = vpop.f32.mrf.mxu0
    %v801 = vpop.f32.mrf.mxu0
    %v802 = vpop.f32.mrf.mxu0
    %803 = vdwg.mxu0
    %804 = vst [vmem:[#allocation10] sm:$0xff] %v799
    %805 = vst [vmem:[#allocation11] sm:$0xff] %v689
    // Predicated region
    $region46: #{tpu_custom_call.1} parent=1 // pred_check
      _
    $region47: #{tpu_custom_call.1} parent=1 // pred_check_branch
      %807 = sbr.rel (0) target = $region49
    $region48: #{tpu_custom_call.1} parent=1 // pred_region
      %s809 = ssub.s32 128, 128
      %810 = vsyncadd [#allocation9], %s809
      %s812 = sshll.u32 [#allocation10], 4
      %s813 = int_to_ptr.vmem [resolvable:$true] %s812
      %815 = dma.vmem_to_hbm [thread:$0]  %s813, 128, %s10, [#allocation9]
    $region49: #{tpu_custom_call.1} parent=1 // pred_fallthru
      _
    // Predicated region
    $region50: #{tpu_custom_call.1} parent=1 // pred_check
      _
    $region51: #{tpu_custom_call.1} parent=1 // pred_check_branch
      %817 = sbr.rel (0) target = $region53
    $region52: #{tpu_custom_call.1} parent=1 // pred_region
      %s819 = ssub.s32 128, 128
      %820 = vsyncadd [#allocation12], %s819
      %s822 = sshll.u32 [#allocation11], 4
      %s823 = int_to_ptr.vmem [resolvable:$true] %s822
      %825 = dma.vmem_to_hbm [thread:$0]  %s823, 128, %s11, [#allocation12]
    $region53: #{tpu_custom_call.1} parent=1 // pred_fallthru
      _
    // Predicated region
    $region54: #{tpu_custom_call.1} parent=1 // pred_check
      _
    $region55: #{tpu_custom_call.1} parent=1 // pred_check_branch
      %827 = sbr.rel (0) target = $region57
    $region56: #{tpu_custom_call.1} parent=1 // pred_region
      %828 = dma.done [#allocation9], 128
    $region57: #{tpu_custom_call.1} parent=1 // pred_fallthru
      _
    // Predicated region
    $region58: #{tpu_custom_call.1} parent=1 // pred_check
      _
    $region59: #{tpu_custom_call.1} parent=1 // pred_check_branch
      %830 = sbr.rel (0) target = $region61
    $region60: #{tpu_custom_call.1} parent=1 // pred_region
      %831 = dma.done [#allocation12], 128
    $region61: #{tpu_custom_call.1} parent=1 // pred_fallthru
      _
    %832 = vsyncpa [#allocation8], 1
    %833 = vsyncpa [#allocation9], 1
    %834 = vsyncpa [#allocation12], 1
  %835 = vsyncmov [#allocation5]
  %s836 = vpop.sfrf %835
  %p837 = scmp.eq.s32.totalorder %s836, 0
  %p838 = pneg %p837
  %840 = shalt.err (%p838)
  %s841 = scalar_lea.sflag [#allocation5], 1
  %842 = vsyncmov %s841
  %s843 = vpop.sfrf %842
  %p844 = scmp.eq.s32.totalorder %s843, 0
  %p845 = pneg %p844
  %847 = shalt.err (%p845)
  %s848 = scalar_lea.sflag [#allocation5], 2
  %849 = vsyncmov %s848
  %s850 = vpop.sfrf %849
  %p851 = scmp.eq.s32.totalorder %s850, 0
  %p852 = pneg %p851
  %854 = shalt.err (%p852)

</llo_original>
